<compile_context>
chip_gen: v5e
topology: v5e:2x2
jax: 0.10.0
libtpu: 0.0.40
codegen_flags: <defaults>
</compile_context>

<pallas_src>
import functools

import jax
import jax.numpy as jnp
from jax import lax
from jax.experimental import pallas as pl
from jax.experimental.pallas import tpu as pltpu

LANES = 128


def _round_up(n, m):
    return ((n + m - 1) // m) * m


def _default_num_batch_tiles():
    # v7x has 2 TensorCores per chip: exactly 2 "parallel" batch tiles puts one
    # on each TC.  v5e/v6e have 1 TC, where the grid is a serial loop, so a
    # single step avoids ~0.35us/step pipeline overhead (weights are resident
    # either way).
    try:
        kind = jax.devices()[0].device_kind.lower()
    except Exception:
        return 1
    return 2 if "v7" in kind else 1


NUM_BATCH_TILES = _default_num_batch_tiles()


# --------------------------------------------------------------------------- #
# Kernels
# --------------------------------------------------------------------------- #
def _mlp_q(x_ref, w1_ref, b1_ref, w2_ref, b2_ref, w3_ref, b3_ref):
    """Shared fused MLP body: bf16 MXU operands, f32 accumulate / elementwise."""
    # In-kernel cast of x to bf16 (VPU slot has slack; avoids a wrapper-side op).
    x = x_ref[...].astype(jnp.bfloat16)
    h = jnp.dot(x, w1_ref[...], preferred_element_type=jnp.float32)
    h = jnp.maximum(h + b1_ref[...], 0.0)
    h = jnp.dot(h.astype(jnp.bfloat16), w2_ref[...],
                preferred_element_type=jnp.float32)
    h = jnp.maximum(h + b2_ref[...], 0.0)
    q = jnp.dot(h.astype(jnp.bfloat16), w3_ref[...],
                preferred_element_type=jnp.float32)
    return q + b3_ref[...]          # (tm, A_pad) f32, padded lanes are exactly 0


def dqn_qvalues_kernel(x_ref, w1_ref, b1_ref, w2_ref, b2_ref, w3_ref, b3_ref,
                       o_ref):
    o_ref[...] = _mlp_q(x_ref, w1_ref, b1_ref, w2_ref, b2_ref, w3_ref,
                        b3_ref).astype(o_ref.dtype)


def dqn_argmax_kernel(x_ref, w1_ref, b1_ref, w2_ref, b2_ref, w3_ref, b3_ref,
                      a_ref, *, action_size):
    q = _mlp_q(x_ref, w1_ref, b1_ref, w2_ref, b2_ref, w3_ref, b3_ref)
    a_pad = q.shape[-1]
    lane = lax.broadcasted_iota(jnp.int32, q.shape, 1)
    # Mask padded lanes (real Q-values can be negative and would lose to the
    # 0-valued padding lanes otherwise).
    q = jnp.where(lane < action_size, q, -jnp.inf)
    best = jnp.max(q, axis=-1, keepdims=True)
    # First index attaining the max (matches jnp.argmax tie-breaking).
    cand = jnp.where(q >= best, lane.astype(jnp.float32), float(a_pad))
    a_ref[...] = jnp.min(cand, axis=-1, keepdims=True).astype(jnp.int32)


# --------------------------------------------------------------------------- #
# Wrappers
# --------------------------------------------------------------------------- #
def _batch_tiling(batch, num_batch_tiles):
    nt = max(1, int(num_batch_tiles))
    # tm multiple of 16: satisfies (8,128) f32 tiling and bf16 sublane packing
    # of the in-kernel cast.
    tm = _round_up(max(1, -(-batch // nt)), 16)
    return tm, tm * nt, nt


def _in_specs(tm, S, H, A_pad):
    return [
        # x: streamed/tiled over the batch grid axis.
        pl.BlockSpec((tm, S), lambda i: (i, 0)),
        # weights / biases: constant block index -> DMA'd once, VMEM-resident
        # for the whole grid (~70 KB total).  Do NOT add extra buffering here.
        pl.BlockSpec((S, H), lambda i: (0, 0)),
        pl.BlockSpec((1, H), lambda i: (0, 0)),
        pl.BlockSpec((H, H), lambda i: (0, 0)),
        pl.BlockSpec((1, H), lambda i: (0, 0)),
        pl.BlockSpec((H, A_pad), lambda i: (0, 0)),
        pl.BlockSpec((1, A_pad), lambda i: (0, 0)),
    ]


def _cost(b_pad, S, H, A_pad, out_bytes):
    flops = 2 * b_pad * (S * H + H * H + H * A_pad)
    # Note: under v7x megacore sharding each TC fetches its own weight copy;
    # this estimate slightly undercounts there (harmless).
    bytes_accessed = (
        b_pad * S * 4                          # f32 x (cast in-kernel)
        + (S * H + H * H + H * A_pad) * 2      # bf16 weights
        + (2 * H + A_pad) * 4                  # f32 biases
        + out_bytes
    )
    return pl.CostEstimate(flops=flops, transcendentals=0,
                           bytes_accessed=bytes_accessed)


@functools.partial(jax.jit, static_argnames=("num_batch_tiles", "out_dtype"))
def dqn_forward_padded(x, params, *, num_batch_tiles=NUM_BATCH_TILES,
                       out_dtype=jnp.float32):
    """Fused DQN forward.

    Returns the PADDED Q block of shape (B_pad, A_pad=128) so the hot path does
    no per-call slice; consumers should slice lazily (q[:B, :A]) or fold the
    slice into the op that consumes the Q-values.  Pass out_dtype=jnp.bfloat16
    to halve the output writeback for very large batches.
    """
    w1, b1, w2, b2, w3, b3 = params
    B, S = x.shape
    H = w1.shape[1]
    A_pad = w3.shape[1]

    tm, b_pad, nt = _batch_tiling(B, num_batch_tiles)
    if b_pad != B:
        x = jnp.zeros((b_pad, S), x.dtype).at[:B].set(x)

    return pl.pallas_call(
        dqn_qvalues_kernel,
        out_shape=jax.ShapeDtypeStruct((b_pad, A_pad), out_dtype),
        grid=(nt,),
        in_specs=_in_specs(tm, S, H, A_pad),
        out_specs=pl.BlockSpec((tm, A_pad), lambda i: (i, 0)),
        compiler_params=pltpu.CompilerParams(
            dimension_semantics=("parallel",),   # shards tiles across v7x TCs
        ),
        cost_estimate=_cost(b_pad, S, H, A_pad,
                            b_pad * A_pad * jnp.dtype(out_dtype).itemsize),
    )(x, w1, b1, w2, b2, w3, b3)


@functools.partial(jax.jit, static_argnames=("action_size", "num_batch_tiles"))
def dqn_act(x, params, *, action_size, num_batch_tiles=NUM_BATCH_TILES):
    """Greedy action selection (DQN act() path).

    Argmax over the true action lanes is computed in-kernel, so the writeback
    is (B, 1) int32 instead of the padded (B, 128) f32 Q block.
    """
    w1, b1, w2, b2, w3, b3 = params
    B, S = x.shape
    H = w1.shape[1]
    A_pad = w3.shape[1]

    tm, b_pad, nt = _batch_tiling(B, num_batch_tiles)
    if b_pad != B:
        x = jnp.zeros((b_pad, S), x.dtype).at[:B].set(x)

    out = pl.pallas_call(
        functools.partial(dqn_argmax_kernel, action_size=action_size),
        out_shape=jax.ShapeDtypeStruct((b_pad, 1), jnp.int32),
        grid=(nt,),
        in_specs=_in_specs(tm, S, H, A_pad),
        out_specs=pl.BlockSpec((tm, 1), lambda i: (i, 0)),
        compiler_params=pltpu.CompilerParams(
            dimension_semantics=("parallel",),
        ),
        cost_estimate=_cost(b_pad, S, H, A_pad, b_pad * 4),
    )(x, w1, b1, w2, b2, w3, b3)
    return out[:B, 0]


# --------------------------------------------------------------------------- #
# Parameter prep (hoisted: call once, reuse for every forward)
# --------------------------------------------------------------------------- #
def prepare_params(w1, b1, w2, b2, w3, b3):
    """Cast weights to bf16 MXU operands, keep biases f32 as (1, out), and pad
    the output layer to a lane-dense 128-wide block.  Done ONCE, outside the
    per-step forward, so pallas_call receives ready-to-use params."""
    def prep_w(w):
        return jnp.asarray(w, jnp.bfloat16)

    def prep_b(b):
        return jnp.asarray(b, jnp.float32).reshape(1, -1)

    H, A = w3.shape
    A_pad = max(LANES, _round_up(A, LANES))
    w3p = jnp.zeros((H, A_pad), jnp.bfloat16).at[:, :A].set(prep_w(w3))
    b3p = jnp.zeros((1, A_pad), jnp.float32).at[:, :A].set(prep_b(b3))
    return (prep_w(w1), prep_b(b1), prep_w(w2), prep_b(b2), w3p, b3p)


def init_params(key, state_size, action_size, hidden=128):
    """Deterministic synthetic init (PyTorch-like uniform fan-in scaling),
    returned already padded/cast via prepare_params."""
    k1, k2, k3, k4, k5, k6 = jax.random.split(key, 6)

    def lin(kw, kb, fan_in, fan_out):
        bound = 1.0 / jnp.sqrt(fan_in)
        w = jax.random.uniform(kw, (fan_in, fan_out), jnp.float32, -bound, bound)
        b = jax.random.uniform(kb, (fan_out,), jnp.float32, -bound, bound)
        return w, b

    w1, b1 = lin(k1, k2, state_size, hidden)
    w2, b2 = lin(k3, k4, hidden, hidden)
    w3, b3 = lin(k5, k6, hidden, action_size)
    return prepare_params(w1, b1, w2, b2, w3, b3)


# --------------------------------------------------------------------------- #
# Self-test
# --------------------------------------------------------------------------- #
if __name__ == "__main__":
    key = jax.random.PRNGKey(0)
    kx, kp = jax.random.split(key)

    batch = 64         # small replay-style batch
    state_size = 16    # env.observation_space.shape[0] (synthetic)
    action_size = 4    # env.action_space.n (synthetic)

    x = jax.random.normal(kx, (batch, state_size), jnp.float32)
    params = init_params(kp, state_size, action_size)

    # Q-value path (padded output; consumer slices lazily).
    q_padded = dqn_forward_padded(x, params)
    jax.block_until_ready(q_padded)
    q = q_padded[:batch, :action_size]

    # Greedy-action path (in-kernel argmax, (B,) int32 writeback).
    actions = dqn_act(x, params, action_size=action_size)
    jax.block_until_ready(actions)

    # Reference in plain JAX with matching bf16-operand / f32-accumulate
    # semantics (note: will not bit-match an f32 PyTorch DQN).
    w1, b1, w2, b2, w3p, b3p = params
    xb = x.astype(jnp.bfloat16)
    ref = jnp.maximum(jnp.dot(xb, w1, preferred_element_type=jnp.float32) + b1, 0.0)
    ref = jnp.maximum(
        jnp.dot(ref.astype(jnp.bfloat16), w2, preferred_element_type=jnp.float32) + b2, 0.0)
    ref = jnp.dot(ref.astype(jnp.bfloat16), w3p, preferred_element_type=jnp.float32) + b3p
    ref = ref[:, :action_size]

    assert q.shape == (batch, action_size)
    assert jnp.allclose(q, ref, atol=1e-2, rtol=1e-2), (
        float(jnp.max(jnp.abs(q - ref))))

    assert actions.shape == (batch,)
    assert bool(jnp.all((actions >= 0) & (actions < action_size)))
    # Tolerant argmax check (robust to MXU-vs-XLA accumulation-order noise):
    chosen = jnp.take_along_axis(ref, actions[:, None], axis=1)[:, 0]
    assert bool(jnp.all(chosen >= ref.max(axis=1) - 1e-3))

    print("KERNEL_OK")
</pallas_src>

<mosaic_0001>
module attributes {stable_mosaic.version = 11 : i64} {
  func.func @dqn_qvalues_kernel(%arg0: i32, %arg1: memref<64x16xf32, #tpu.memory_space<vmem>>, %arg2: memref<16x128xbf16, #tpu.memory_space<vmem>>, %arg3: memref<1x128xf32, #tpu.memory_space<vmem>>, %arg4: memref<128x128xbf16, #tpu.memory_space<vmem>>, %arg5: memref<1x128xf32, #tpu.memory_space<vmem>>, %arg6: memref<128x128xbf16, #tpu.memory_space<vmem>>, %arg7: memref<1x128xf32, #tpu.memory_space<vmem>>, %arg8: memref<64x128xf32, #tpu.memory_space<vmem>>) attributes {dimension_semantics = [#tpu.dimension_semantics<parallel>], iteration_bounds = array<i64: 1>, scalar_prefetch = 0 : i64, scratch_operands = 0 : i64, tpu.core_type = #tpu.core_type<tc>, window_params = [{transform_indices = @transform_0, window_bounds = array<i64: 64, 16>}, {pipeline_mode = #tpu.pipeline_mode<synchronous>, transform_indices = @transform_1, window_bounds = array<i64: 16, 128>}, {pipeline_mode = #tpu.pipeline_mode<synchronous>, transform_indices = @transform_2, window_bounds = array<i64: 1, 128>}, {pipeline_mode = #tpu.pipeline_mode<synchronous>, transform_indices = @transform_3, window_bounds = array<i64: 128, 128>}, {pipeline_mode = #tpu.pipeline_mode<synchronous>, transform_indices = @transform_4, window_bounds = array<i64: 1, 128>}, {pipeline_mode = #tpu.pipeline_mode<synchronous>, transform_indices = @transform_5, window_bounds = array<i64: 128, 128>}, {pipeline_mode = #tpu.pipeline_mode<synchronous>, transform_indices = @transform_6, window_bounds = array<i64: 1, 128>}, {transform_indices = @transform_7, window_bounds = array<i64: 64, 128>}]} {
    %c0 = arith.constant 0 : index
    %c0_0 = arith.constant 0 : index
    %0 = vector.load %arg1[%c0, %c0_0] : memref<64x16xf32, #tpu.memory_space<vmem>>, vector<64x16xf32>
    %1 = arith.truncf %0 : vector<64x16xf32> to vector<64x16xbf16>
    %c0_1 = arith.constant 0 : index
    %c0_2 = arith.constant 0 : index
    %2 = vector.load %arg2[%c0_1, %c0_2] : memref<16x128xbf16, #tpu.memory_space<vmem>>, vector<16x128xbf16>
    %cst = arith.constant dense<0.000000e+00> : vector<64x128xf32>
    %3 = tpu.matmul %1, %2, %cst {dimension_numbers = #tpu.dot_dimension_numbers<[1], [0], [0], [1], [0, 0, 1, 1], [], []>} : vector<64x16xbf16>, vector<16x128xbf16>, vector<64x128xf32> -> vector<64x128xf32>
    %c0_3 = arith.constant 0 : index
    %c0_4 = arith.constant 0 : index
    %4 = vector.load %arg3[%c0_3, %c0_4] : memref<1x128xf32, #tpu.memory_space<vmem>>, vector<1x128xf32>
    %5 = vector.broadcast %4 : vector<1x128xf32> to vector<64x128xf32>
    %6 = arith.addf %3, %5 : vector<64x128xf32>
    %cst_5 = arith.constant 0.000000e+00 : f32
    %7 = vector.broadcast %cst_5 : f32 to vector<64x128xf32>
    %8 = arith.maximumf %6, %7 : vector<64x128xf32>
    %9 = arith.truncf %8 : vector<64x128xf32> to vector<64x128xbf16>
    %c0_6 = arith.constant 0 : index
    %c0_7 = arith.constant 0 : index
    %10 = vector.load %arg4[%c0_6, %c0_7] : memref<128x128xbf16, #tpu.memory_space<vmem>>, vector<128x128xbf16>
    %cst_8 = arith.constant dense<0.000000e+00> : vector<64x128xf32>
    %11 = tpu.matmul %9, %10, %cst_8 {dimension_numbers = #tpu.dot_dimension_numbers<[1], [0], [0], [1], [0, 0, 1, 1], [], []>} : vector<64x128xbf16>, vector<128x128xbf16>, vector<64x128xf32> -> vector<64x128xf32>
    %c0_9 = arith.constant 0 : index
    %c0_10 = arith.constant 0 : index
    %12 = vector.load %arg5[%c0_9, %c0_10] : memref<1x128xf32, #tpu.memory_space<vmem>>, vector<1x128xf32>
    %13 = vector.broadcast %12 : vector<1x128xf32> to vector<64x128xf32>
    %14 = arith.addf %11, %13 : vector<64x128xf32>
    %cst_11 = arith.constant 0.000000e+00 : f32
    %15 = vector.broadcast %cst_11 : f32 to vector<64x128xf32>
    %16 = arith.maximumf %14, %15 : vector<64x128xf32>
    %17 = arith.truncf %16 : vector<64x128xf32> to vector<64x128xbf16>
    %c0_12 = arith.constant 0 : index
    %c0_13 = arith.constant 0 : index
    %18 = vector.load %arg6[%c0_12, %c0_13] : memref<128x128xbf16, #tpu.memory_space<vmem>>, vector<128x128xbf16>
    %cst_14 = arith.constant dense<0.000000e+00> : vector<64x128xf32>
    %19 = tpu.matmul %17, %18, %cst_14 {dimension_numbers = #tpu.dot_dimension_numbers<[1], [0], [0], [1], [0, 0, 1, 1], [], []>} : vector<64x128xbf16>, vector<128x128xbf16>, vector<64x128xf32> -> vector<64x128xf32>
    %c0_15 = arith.constant 0 : index
    %c0_16 = arith.constant 0 : index
    %20 = vector.load %arg7[%c0_15, %c0_16] : memref<1x128xf32, #tpu.memory_space<vmem>>, vector<1x128xf32>
    %21 = vector.broadcast %20 : vector<1x128xf32> to vector<64x128xf32>
    %22 = arith.addf %19, %21 : vector<64x128xf32>
    %c0_17 = arith.constant 0 : index
    %c0_18 = arith.constant 0 : index
    %23 = vector.load %arg8[%c0_17, %c0_18] : memref<64x128xf32, #tpu.memory_space<vmem>>, vector<64x128xf32>
    tpu.vector_store %arg8[%c0_17, %c0_18], %22 {strides = array<i32>} : memref<64x128xf32, #tpu.memory_space<vmem>>, vector<64x128xf32>,
    return
  }
  func.func @transform_0(%arg0: i32) -> (i32, i32) {
    %c0_i32 = arith.constant 0 : i32
    %c0_i32_0 = arith.constant 0 : i32
    return %arg0, %c0_i32 : i32, i32
  }
  func.func @transform_1(%arg0: i32) -> (i32, i32) {
    %c0_i32 = arith.constant 0 : i32
    %c0_i32_0 = arith.constant 0 : i32
    %c0_i32_1 = arith.constant 0 : i32
    return %c0_i32, %c0_i32_0 : i32, i32
  }
  func.func @transform_2(%arg0: i32) -> (i32, i32) {
    %c0_i32 = arith.constant 0 : i32
    %c0_i32_0 = arith.constant 0 : i32
    %c0_i32_1 = arith.constant 0 : i32
    return %c0_i32, %c0_i32_0 : i32, i32
  }
  func.func @transform_3(%arg0: i32) -> (i32, i32) {
    %c0_i32 = arith.constant 0 : i32
    %c0_i32_0 = arith.constant 0 : i32
    %c0_i32_1 = arith.constant 0 : i32
    return %c0_i32, %c0_i32_0 : i32, i32
  }
  func.func @transform_4(%arg0: i32) -> (i32, i32) {
    %c0_i32 = arith.constant 0 : i32
    %c0_i32_0 = arith.constant 0 : i32
    %c0_i32_1 = arith.constant 0 : i32
    return %c0_i32, %c0_i32_0 : i32, i32
  }
  func.func @transform_5(%arg0: i32) -> (i32, i32) {
    %c0_i32 = arith.constant 0 : i32
    %c0_i32_0 = arith.constant 0 : i32
    %c0_i32_1 = arith.constant 0 : i32
    return %c0_i32, %c0_i32_0 : i32, i32
  }
  func.func @transform_6(%arg0: i32) -> (i32, i32) {
    %c0_i32 = arith.constant 0 : i32
    %c0_i32_0 = arith.constant 0 : i32
    %c0_i32_1 = arith.constant 0 : i32
    return %c0_i32, %c0_i32_0 : i32, i32
  }
  func.func @transform_7(%arg0: i32) -> (i32, i32) {
    %c0_i32 = arith.constant 0 : i32
    %c0_i32_0 = arith.constant 0 : i32
    return %arg0, %c0_i32 : i32, i32
  }
}

</mosaic_0001>

<llo_original>
// kernel: dqn_forward_padded.1
$region0: #{dqn_forward_padded.1}
  #allocation0 [shape = 'u32[]', space=smem, size = 0x4, offset = 0x4, fixed_abs, tag = 'smem constant byte address 0x4 - core index']
  #allocation1 [shape = 'u32[72,128]{1,0:T(1,128)}', space=vmem, size = 0x9000, scoped, tag = 'internal scratch']
  %s0 = inlined_call_operand.vmem [shape: f32[64,16], index: 0, kind: input, shape index: {}]
  %s1 = inlined_call_operand.vmem [shape: bf16[16,128], index: 1, kind: input, shape index: {}]
  %s2 = inlined_call_operand.vmem [shape: f32[1,128], index: 2, kind: input, shape index: {}]
  %s3 = inlined_call_operand.vmem [shape: bf16[128,128], index: 3, kind: input, shape index: {}]
  %s4 = inlined_call_operand.vmem [shape: f32[1,128], index: 4, kind: input, shape index: {}]
  %s5 = inlined_call_operand.hbm [shape: bf16[128,128], index: 5, kind: input, shape index: {}]
  %s6 = inlined_call_operand.vmem [shape: f32[1,128], index: 6, kind: input, shape index: {}]
  %s7 = inlined_call_operand.hbm [shape: f32[64,128], index: 7, kind: output, shape index: {}]
  %s8 = sld [smem:[#allocation0]]
  $region42: #{dqn_forward_padded.1} parent=0
    _
  %s10 = ssub.s32 1, %s8
  %s11 = scalar_select 0, %s10, %s8
  $region1: #{dqn_forward_padded.1} parent=0
    #allocation2 [shape = 'u8[32768]{0}', space=vmem, size = 0x8000, scoped, tag = 'input window, operand 5, single buffered']
    #allocation3 [shape = 's32[1]{0}', space=sflag, size = 0x4, scoped, tag = 'scoped memory for dqn_forward_padded.1']
    #allocation4 [shape = 's32[1]{0}', space=sflag, size = 0x4, scoped, tag = 'scoped memory for dqn_forward_padded.1']
    #allocation5 [shape = 'u8[32768]{0}', space=vmem, size = 0x8000, scoped, tag = 'output window, operand 0, single buffered']
    %12 = vsyncpa [#allocation3], 0
    %13 = vsyncpa [#allocation4], 0
    // Predicated region
    $region2: #{dqn_forward_padded.1} parent=1 // pred_check
      _
    $region3: #{dqn_forward_padded.1} parent=1 // pred_check_branch
      %15 = sbr.rel (0) target = $region5
    $region4: #{dqn_forward_padded.1} parent=1 // pred_region
      _
    $region5: #{dqn_forward_padded.1} parent=1 // pred_fallthru
      _
    // Predicated region
    $region6: #{dqn_forward_padded.1} parent=1 // pred_check
      _
    $region7: #{dqn_forward_padded.1} parent=1 // pred_check_branch
      %17 = sbr.rel (0) target = $region9
    $region8: #{dqn_forward_padded.1} parent=1 // pred_region
      _
    $region9: #{dqn_forward_padded.1} parent=1 // pred_fallthru
      _
    // Predicated region
    $region10: #{dqn_forward_padded.1} parent=1 // pred_check
      _
    $region11: #{dqn_forward_padded.1} parent=1 // pred_check_branch
      %19 = sbr.rel (0) target = $region13
    $region12: #{dqn_forward_padded.1} parent=1 // pred_region
      _
    $region13: #{dqn_forward_padded.1} parent=1 // pred_fallthru
      _
    // Predicated region
    $region14: #{dqn_forward_padded.1} parent=1 // pred_check
      _
    $region15: #{dqn_forward_padded.1} parent=1 // pred_check_branch
      %21 = sbr.rel (0) target = $region17
    $region16: #{dqn_forward_padded.1} parent=1 // pred_region
      _
    $region17: #{dqn_forward_padded.1} parent=1 // pred_fallthru
      _
    // Predicated region
    $region18: #{dqn_forward_padded.1} parent=1 // pred_check
      _
    $region19: #{dqn_forward_padded.1} parent=1 // pred_check_branch
      %23 = sbr.rel (0) target = $region21
    $region20: #{dqn_forward_padded.1} parent=1 // pred_region
      _
    $region21: #{dqn_forward_padded.1} parent=1 // pred_fallthru
      _
    // Predicated region
    $region22: #{dqn_forward_padded.1} parent=1 // pred_check
      _
    $region23: #{dqn_forward_padded.1} parent=1 // pred_check_branch
      %25 = sbr.rel (0) target = $region25
    $region24: #{dqn_forward_padded.1} parent=1 // pred_region
      %27 = vsyncadd [#allocation3], 0
      %s28 = sshll.u32 %s5, 4
      %s29 = int_to_ptr.hbm [resolvable:$true] %s28
      %s30 = sshll.u32 [#allocation2], 4
      %s31 = int_to_ptr.vmem [resolvable:$true] %s30
      %36 = dma.hbm_to_vmem [thread:$0]  %s29, 1024, %s31, [#allocation3], 64, 64, 4
    $region25: #{dqn_forward_padded.1} parent=1 // pred_fallthru
      _
    // Predicated region
    $region26: #{dqn_forward_padded.1} parent=1 // pred_check
      _
    $region27: #{dqn_forward_padded.1} parent=1 // pred_check_branch
      %38 = sbr.rel (0) target = $region29
    $region28: #{dqn_forward_padded.1} parent=1 // pred_region
      _
    $region29: #{dqn_forward_padded.1} parent=1 // pred_fallthru
      _
    // Predicated region
    $region30: #{dqn_forward_padded.1} parent=1 // pred_check
      _
    $region31: #{dqn_forward_padded.1} parent=1 // pred_check_branch
      %40 = sbr.rel (0) target = $region33
    $region32: #{dqn_forward_padded.1} parent=1 // pred_region
      %42 = dma.done [#allocation3], 1024
    $region33: #{dqn_forward_padded.1} parent=1 // pred_fallthru
      _
    %v44 = vld [vmem:[%s0] sm:$0xff]
    %v45 = vld [vmem:[%s0 + $0x8] sm:$0xff]
    %v46 = vld [vmem:[%s0 + $0x10] sm:$0xff]
    %v47 = vld [vmem:[%s0 + $0x18] sm:$0xff]
    %v48 = vld [vmem:[%s0 + $0x20] sm:$0xff]
    %v49 = vld [vmem:[%s0 + $0x28] sm:$0xff]
    %v50 = vld [vmem:[%s0 + $0x30] sm:$0xff]
    %v51 = vld [vmem:[%s0 + $0x38] sm:$0xff]
    %v52 = vpack.c.bf16 %v45, %v44
    %v53 = vpack.c.bf16 %v47, %v46
    %v54 = vpack.c.bf16 %v49, %v48
    %v55 = vpack.c.bf16 %v51, %v50
    %v56 = vld [vmem:[%s1] sm:$0xf]
    %v57 = vld [vmem:[%s1 + $0x4] sm:$0xf]
    %v58 = vld [vmem:[%s2] sm:$0x1]
    %v60 = vperm.slane %v58, 0
    %v64 = vunpack.c.l.b16 %v56
    %v65 = vunpack.c.l.b16 %v57
    %v66 = vpack.c.b16 %v65, %v64
    %vm68 = vcmask 130048
    %v70 = vsel %vm68, %v52, 0
    %v73 = vsel %vm68, %v53, 0
    %v76 = vsel %vm68, %v54, 0
    %v79 = vsel %vm68, %v55, 0
    %81 = vmatpush.bf16.msra.mxu0 0
    %82 = vmatpush.bf16.msra.mxu0 0
    %83 = vmatpush.bf16.msra.mxu0 0
    %84 = vmatpush.bf16.msra.mxu0 0
    %85 = vmatpush.bf16.msra.mxu0 0
    %86 = vmatpush.bf16.msra.mxu0 0
    %87 = vmatpush.bf16.msra.mxu0 0
    %88 = vmatpush.bf16.msra.mxu0 %v66
    %89 = vmatmul.bf16.gmra.mxu0 %v70
    %v90 = vpop.f32.mrf.mxu0
    %v91 = vadd.f32 %v60, %v90
    %v92 = vpop.f32.mrf.mxu0
    %v93 = vadd.f32 %v60, %v92
    %94 = vmatmul.bf16.gmra.mxu0 %v73
    %v95 = vpop.f32.mrf.mxu0
    %v96 = vadd.f32 %v60, %v95
    %v97 = vpop.f32.mrf.mxu0
    %v98 = vadd.f32 %v60, %v97
    %99 = vmatmul.bf16.gmra.mxu0 %v76
    %v100 = vpop.f32.mrf.mxu0
    %v101 = vadd.f32 %v60, %v100
    %v102 = vpop.f32.mrf.mxu0
    %v103 = vadd.f32 %v60, %v102
    %104 = vmatmul.bf16.gmra.mxu0 %v79
    %v105 = vpop.f32.mrf.mxu0
    %v106 = vadd.f32 %v60, %v105
    %v107 = vpop.f32.mrf.mxu0
    %v108 = vadd.f32 %v60, %v107
    %109 = vdwg.mxu0
    %v110 = vmax.f32 %v91, 0.0
    %v111 = vmax.f32 %v93, 0.0
    %v112 = vmax.f32 %v96, 0.0
    %v113 = vmax.f32 %v98, 0.0
    %v114 = vmax.f32 %v101, 0.0
    %v115 = vmax.f32 %v103, 0.0
    %v116 = vmax.f32 %v106, 0.0
    %v117 = vmax.f32 %v108, 0.0
    %v118 = vpack.c.bf16 %v111, %v110
    %v119 = vpack.c.bf16 %v113, %v112
    %v120 = vpack.c.bf16 %v115, %v114
    %v121 = vpack.c.bf16 %v117, %v116
    %v122 = vld [vmem:[%s3] sm:$0xf]
    %v123 = vld [vmem:[%s3 + $0x4] sm:$0xf]
    %v124 = vld [vmem:[%s3 + $0x8] sm:$0xf]
    %v125 = vld [vmem:[%s3 + $0xc] sm:$0xf]
    %v126 = vld [vmem:[%s3 + $0x10] sm:$0xf]
    %v127 = vld [vmem:[%s3 + $0x14] sm:$0xf]
    %v128 = vld [vmem:[%s3 + $0x18] sm:$0xf]
    %v129 = vld [vmem:[%s3 + $0x1c] sm:$0xf]
    %v130 = vld [vmem:[%s3 + $0x20] sm:$0xf]
    %v131 = vld [vmem:[%s3 + $0x24] sm:$0xf]
    %v132 = vld [vmem:[%s3 + $0x28] sm:$0xf]
    %v133 = vld [vmem:[%s3 + $0x2c] sm:$0xf]
    %v134 = vld [vmem:[%s3 + $0x30] sm:$0xf]
    %v135 = vld [vmem:[%s3 + $0x34] sm:$0xf]
    %v136 = vld [vmem:[%s3 + $0x38] sm:$0xf]
    %v137 = vld [vmem:[%s3 + $0x3c] sm:$0xf]
    %v138 = vld [vmem:[%s4] sm:$0x1]
    %v140 = vperm.slane %v138, 0
    %v158 = vunpack.c.l.b16 %v122
    %v159 = vunpack.c.l.b16 %v123
    %v160 = vunpack.c.l.b16 %v124
    %v161 = vunpack.c.l.b16 %v125
    %v162 = vunpack.c.l.b16 %v126
    %v163 = vunpack.c.l.b16 %v127
    %v164 = vunpack.c.l.b16 %v128
    %v165 = vunpack.c.l.b16 %v129
    %v166 = vunpack.c.l.b16 %v130
    %v167 = vunpack.c.l.b16 %v131
    %v168 = vunpack.c.l.b16 %v132
    %v169 = vunpack.c.l.b16 %v133
    %v170 = vunpack.c.l.b16 %v134
    %v171 = vunpack.c.l.b16 %v135
    %v172 = vunpack.c.l.b16 %v136
    %v173 = vunpack.c.l.b16 %v137
    %v174 = vpack.c.b16 %v159, %v158
    %v175 = vpack.c.b16 %v161, %v160
    %v176 = vpack.c.b16 %v163, %v162
    %v177 = vpack.c.b16 %v165, %v164
    %v178 = vpack.c.b16 %v167, %v166
    %v179 = vpack.c.b16 %v169, %v168
    %v180 = vpack.c.b16 %v171, %v170
    %v181 = vpack.c.b16 %v173, %v172
    %190 = vmatpush.bf16.msra.mxu0 %v181
    %191 = vmatpush.bf16.msra.mxu0 %v180
    %192 = vmatpush.bf16.msra.mxu0 %v179
    %193 = vmatpush.bf16.msra.mxu0 %v178
    %194 = vmatpush.bf16.msra.mxu0 %v177
    %195 = vmatpush.bf16.msra.mxu0 %v176
    %196 = vmatpush.bf16.msra.mxu0 %v175
    %197 = vmatpush.bf16.msra.mxu0 %v174
    %198 = vmatmul.bf16.gmra.mxu0 %v118
    %v199 = vpop.f32.mrf.mxu0
    %v200 = vadd.f32 %v140, %v199
    %v201 = vpop.f32.mrf.mxu0
    %v202 = vadd.f32 %v140, %v201
    %203 = vmatmul.bf16.gmra.mxu0 %v119
    %v204 = vpop.f32.mrf.mxu0
    %v205 = vadd.f32 %v140, %v204
    %v206 = vpop.f32.mrf.mxu0
    %v207 = vadd.f32 %v140, %v206
    %208 = vmatmul.bf16.gmra.mxu0 %v120
    %v209 = vpop.f32.mrf.mxu0
    %v210 = vadd.f32 %v140, %v209
    %v211 = vpop.f32.mrf.mxu0
    %v212 = vadd.f32 %v140, %v211
    %213 = vmatmul.bf16.gmra.mxu0 %v121
    %v214 = vpop.f32.mrf.mxu0
    %v215 = vadd.f32 %v140, %v214
    %v216 = vpop.f32.mrf.mxu0
    %v217 = vadd.f32 %v140, %v216
    %218 = vdwg.mxu0
    %v219 = vmax.f32 %v200, 0.0
    %v220 = vmax.f32 %v202, 0.0
    %v221 = vmax.f32 %v205, 0.0
    %v222 = vmax.f32 %v207, 0.0
    %v223 = vmax.f32 %v210, 0.0
    %v224 = vmax.f32 %v212, 0.0
    %v225 = vmax.f32 %v215, 0.0
    %v226 = vmax.f32 %v217, 0.0
    %v227 = vpack.c.bf16 %v220, %v219
    %v228 = vpack.c.bf16 %v222, %v221
    %v229 = vpack.c.bf16 %v224, %v223
    %v230 = vpack.c.bf16 %v226, %v225
    %v231 = vld [vmem:[#allocation2] sm:$0xf]
    %v232 = vld [vmem:[#allocation2 + $0x4] sm:$0xf]
    %v233 = vld [vmem:[#allocation2 + $0x8] sm:$0xf]
    %v234 = vld [vmem:[#allocation2 + $0xc] sm:$0xf]
    %v235 = vld [vmem:[#allocation2 + $0x10] sm:$0xf]
    %v236 = vld [vmem:[#allocation2 + $0x14] sm:$0xf]
    %v237 = vld [vmem:[#allocation2 + $0x18] sm:$0xf]
    %v238 = vld [vmem:[#allocation2 + $0x1c] sm:$0xf]
    %v239 = vld [vmem:[#allocation2 + $0x20] sm:$0xf]
    %v240 = vld [vmem:[#allocation2 + $0x24] sm:$0xf]
    %v241 = vld [vmem:[#allocation2 + $0x28] sm:$0xf]
    %v242 = vld [vmem:[#allocation2 + $0x2c] sm:$0xf]
    %v243 = vld [vmem:[#allocation2 + $0x30] sm:$0xf]
    %v244 = vld [vmem:[#allocation2 + $0x34] sm:$0xf]
    %v245 = vld [vmem:[#allocation2 + $0x38] sm:$0xf]
    %v246 = vld [vmem:[#allocation2 + $0x3c] sm:$0xf]
    %v247 = vld [vmem:[%s6] sm:$0x1]
    %v249 = vperm.slane %v247, 0
    %v267 = vunpack.c.l.b16 %v231
    %v268 = vunpack.c.l.b16 %v232
    %v269 = vunpack.c.l.b16 %v233
    %v270 = vunpack.c.l.b16 %v234
    %v271 = vunpack.c.l.b16 %v235
    %v272 = vunpack.c.l.b16 %v236
    %v273 = vunpack.c.l.b16 %v237
    %v274 = vunpack.c.l.b16 %v238
    %v275 = vunpack.c.l.b16 %v239
    %v276 = vunpack.c.l.b16 %v240
    %v277 = vunpack.c.l.b16 %v241
    %v278 = vunpack.c.l.b16 %v242
    %v279 = vunpack.c.l.b16 %v243
    %v280 = vunpack.c.l.b16 %v244
    %v281 = vunpack.c.l.b16 %v245
    %v282 = vunpack.c.l.b16 %v246
    %v283 = vpack.c.b16 %v268, %v267
    %v284 = vpack.c.b16 %v270, %v269
    %v285 = vpack.c.b16 %v272, %v271
    %v286 = vpack.c.b16 %v274, %v273
    %v287 = vpack.c.b16 %v276, %v275
    %v288 = vpack.c.b16 %v278, %v277
    %v289 = vpack.c.b16 %v280, %v279
    %v290 = vpack.c.b16 %v282, %v281
    %299 = vmatpush.bf16.msra.mxu0 %v290
    %300 = vmatpush.bf16.msra.mxu0 %v289
    %301 = vmatpush.bf16.msra.mxu0 %v288
    %302 = vmatpush.bf16.msra.mxu0 %v287
    %303 = vmatpush.bf16.msra.mxu0 %v286
    %304 = vmatpush.bf16.msra.mxu0 %v285
    %305 = vmatpush.bf16.msra.mxu0 %v284
    %306 = vmatpush.bf16.msra.mxu0 %v283
    %307 = vmatmul.bf16.gmra.mxu0 %v227
    %v308 = vpop.f32.mrf.mxu0
    %v309 = vadd.f32 %v249, %v308
    %v310 = vpop.f32.mrf.mxu0
    %v311 = vadd.f32 %v249, %v310
    %312 = vmatmul.bf16.gmra.mxu0 %v228
    %v313 = vpop.f32.mrf.mxu0
    %v314 = vadd.f32 %v249, %v313
    %v315 = vpop.f32.mrf.mxu0
    %v316 = vadd.f32 %v249, %v315
    %317 = vmatmul.bf16.gmra.mxu0 %v229
    %v318 = vpop.f32.mrf.mxu0
    %v319 = vadd.f32 %v249, %v318
    %v320 = vpop.f32.mrf.mxu0
    %v321 = vadd.f32 %v249, %v320
    %322 = vmatmul.bf16.gmra.mxu0 %v230
    %v323 = vpop.f32.mrf.mxu0
    %v324 = vadd.f32 %v249, %v323
    %v325 = vpop.f32.mrf.mxu0
    %v326 = vadd.f32 %v249, %v325
    %327 = vdwg.mxu0
    %328 = vst [vmem:[#allocation5] sm:$0xff] %v309
    %329 = vst [vmem:[#allocation5 + $0x8] sm:$0xff] %v311
    %330 = vst [vmem:[#allocation5 + $0x10] sm:$0xff] %v314
    %331 = vst [vmem:[#allocation5 + $0x18] sm:$0xff] %v316
    %332 = vst [vmem:[#allocation5 + $0x20] sm:$0xff] %v319
    %333 = vst [vmem:[#allocation5 + $0x28] sm:$0xff] %v321
    %334 = vst [vmem:[#allocation5 + $0x30] sm:$0xff] %v324
    %335 = vst [vmem:[#allocation5 + $0x38] sm:$0xff] %v326
    // Predicated region
    $region34: #{dqn_forward_padded.1} parent=1 // pred_check
      _
    $region35: #{dqn_forward_padded.1} parent=1 // pred_check_branch
      %337 = sbr.rel (0) target = $region37
    $region36: #{dqn_forward_padded.1} parent=1 // pred_region
      %339 = vsyncadd [#allocation4], 0
      %s340 = sshll.u32 [#allocation5], 4
      %s341 = int_to_ptr.vmem [resolvable:$true] %s340
      %s342 = sshll.u32 %s7, 4
      %s343 = int_to_ptr.hbm [resolvable:$true] %s342
      %348 = dma.vmem_to_hbm [thread:$0]  %s341, 1024, %s343, [#allocation4], 128, 128, 8
    $region37: #{dqn_forward_padded.1} parent=1 // pred_fallthru
      _
    // Predicated region
    $region38: #{dqn_forward_padded.1} parent=1 // pred_check
      _
    $region39: #{dqn_forward_padded.1} parent=1 // pred_check_branch
      %350 = sbr.rel (0) target = $region41
    $region40: #{dqn_forward_padded.1} parent=1 // pred_region
      %352 = dma.done [#allocation4], 1024
    $region41: #{dqn_forward_padded.1} parent=1 // pred_fallthru
      _
    %353 = vsyncpa [#allocation3], 1
    %354 = vsyncpa [#allocation4], 1

</llo_original>
